<compile_context>
chip_gen: v6e
topology: v6e:2x2x1
jax: 0.10.0
libtpu: 0.0.40
codegen_flags: <defaults>
</compile_context>

<pallas_src>
import functools

import jax
import jax.numpy as jnp
from jax.experimental import pallas as pl
from jax.experimental.pallas import tpu as pltpu


def _round_up(x: int, m: int) -> int:
    return ((x + m - 1) // m) * m


def _vmem_limit(*byte_counts: int) -> int:
    """Explicit scoped-VMEM limit: needed + headroom, floored at 16 MiB and
    capped at 64 MiB (v7x physical per-TC VMEM)."""
    need = sum(byte_counts)
    return int(min(max(need + (4 << 20), 16 << 20), 64 << 20))


# ---------------------------------------------------------------------------
# Kernels
# ---------------------------------------------------------------------------

def _linear_kernel(feat_ref, w_ref, out_ref, *, active: bool):
    # support_tile = features_tile @ weight  (MXU, f32 accumulation)
    s = jnp.dot(feat_ref[...], w_ref[...], preferred_element_type=jnp.float32)
    if active:
        # LeakyReLU(0.2) — matches torch.nn.LeakyReLU(0.2)
        s = jnp.where(s > 0, s, 0.2 * s)
    out_ref[...] = s


def _spmm_kernel(adj_ref, x_ref, out_ref):
    # out_tile = adj_rows_tile @ X   (X fully resident, f32 accumulation)
    out_ref[...] = jnp.dot(adj_ref[...], x_ref[...],
                           preferred_element_type=jnp.float32)


# ---------------------------------------------------------------------------
# pallas_call wrappers
# ---------------------------------------------------------------------------

def _linear_call(features_p, weight_p, tm, active, vmem_limit):
    n_pad, f_in = features_p.shape
    _, f_pad = weight_p.shape
    return pl.pallas_call(
        functools.partial(_linear_kernel, active=active),
        out_shape=jax.ShapeDtypeStruct((n_pad, f_pad), jnp.float32),
        grid=(n_pad // tm,),
        in_specs=[
            pl.BlockSpec((tm, f_in), lambda i: (i, 0)),      # features rows
            pl.BlockSpec((f_in, f_pad), lambda i: (0, 0)),   # weight (resident)
        ],
        out_specs=pl.BlockSpec((tm, f_pad), lambda i: (i, 0)),
        compiler_params=pltpu.CompilerParams(
            dimension_semantics=("parallel",),
            vmem_limit_bytes=vmem_limit),
    )(features_p, weight_p)


def _spmm_call(adj_p, x_p, tm, vmem_limit):
    n_pad = adj_p.shape[0]
    f_pad = x_p.shape[1]
    return pl.pallas_call(
        _spmm_kernel,
        out_shape=jax.ShapeDtypeStruct((n_pad, f_pad), jnp.float32),
        grid=(n_pad // tm,),
        in_specs=[
            pl.BlockSpec((tm, n_pad), lambda i: (i, 0)),     # adj row tiles
            pl.BlockSpec((n_pad, f_pad), lambda i: (0, 0)),  # X (resident)
        ],
        out_specs=pl.BlockSpec((tm, f_pad), lambda i: (i, 0)),
        compiler_params=pltpu.CompilerParams(
            dimension_semantics=("parallel",),
            vmem_limit_bytes=vmem_limit),
    )(adj_p, x_p)


# ---------------------------------------------------------------------------
# Public forward
# ---------------------------------------------------------------------------

def gnn_layer(features: jax.Array, weight: jax.Array, adj: jax.Array,
              active: bool = False):
    """Fused GNNLayer forward. Returns (output, az)."""
    n, f_in = features.shape
    f_in_w, f_out = weight.shape
    assert f_in == f_in_w, "features / weight inner dims must match"
    assert adj.shape == (n, n), "adj must be (N, N)"

    features = features.astype(jnp.float32)
    weight = weight.astype(jnp.float32)
    adj = adj.astype(jnp.float32)

    # Lane-dense feature padding (multiple of 128 -> unmasked vector stores).
    f_pad = _round_up(f_out, 128)

    # Row tile: largest tile whose double-buffered adj rows fit a conservative
    # budget (sized for v7x's 64 MiB VMEM; generous on v5e/v6e's 128 MiB).
    n8 = _round_up(n, 8)
    tm = 256
    adj_tile_budget = 16 << 20                      # 2 x (tm, n) f32 buffers
    while tm > 8 and 2 * tm * n8 * 4 > adj_tile_budget:
        tm //= 2
    tm = max(8, min(tm, n8))
    n_pad = _round_up(n, tm)

    # Zero padding is exact: padded adj rows/cols and weight cols contribute 0,
    # and LeakyReLU(0) == 0.
    features_p = jnp.pad(features, ((0, n_pad - n), (0, 0)))
    weight_p = jnp.pad(weight, ((0, 0), (0, f_pad - f_out)))
    adj_p = jnp.pad(adj, ((0, n_pad - n), (0, n_pad - n)))

    lin_vmem = _vmem_limit(2 * tm * f_in * 4,
                           2 * f_in * f_pad * 4,
                           2 * tm * f_pad * 4)
    spmm_vmem = _vmem_limit(2 * tm * n_pad * 4,
                            2 * n_pad * f_pad * 4,
                            2 * tm * f_pad * 4)

    support = _linear_call(features_p, weight_p, tm, active, lin_vmem)
    output_p = _spmm_call(adj_p, support, tm, spmm_vmem)
    az_p = _spmm_call(adj_p, output_p, tm, spmm_vmem)

    # Strip padding (cheap wrapper-side slice).
    return output_p[:n, :f_out], az_p[:n, :f_out]


def xavier_uniform(key, in_features, out_features, dtype=jnp.float32):
    # Matches torch.nn.init.xavier_uniform_ for an (in, out) matrix.
    bound = (6.0 / (in_features + out_features)) ** 0.5
    return jax.random.uniform(key, (in_features, out_features),
                              dtype=dtype, minval=-bound, maxval=bound)


if __name__ == "__main__":
    # Small shapes consistent with the module: N nodes, in/out features.
    N, F_IN, F_OUT = 128, 64, 64

    key = jax.random.PRNGKey(0)
    k_feat, k_w, k_adj = jax.random.split(key, 3)

    features = jax.random.normal(k_feat, (N, F_IN), dtype=jnp.float32)
    weight = xavier_uniform(k_w, F_IN, F_OUT)

    # Dense row-normalized adjacency (stand-in for the sparse adj in spmm).
    adj_raw = jax.random.uniform(k_adj, (N, N), dtype=jnp.float32)
    adj = adj_raw / jnp.sum(adj_raw, axis=-1, keepdims=True)

    # Run kernel (active=True exercises the LeakyReLU path too).
    output, az = gnn_layer(features, weight, adj, active=True)
    jax.block_until_ready((output, az))

    # Reference check in plain JAX.
    support_ref = features @ weight
    support_ref = jnp.where(support_ref > 0, support_ref, 0.2 * support_ref)
    output_ref = adj @ support_ref
    az_ref = adj @ output_ref

    assert jnp.allclose(output, output_ref, atol=1e-4, rtol=1e-4)
    assert jnp.allclose(az, az_ref, atol=1e-4, rtol=1e-4)

    # Also check the inactive path.
    output2, az2 = gnn_layer(features, weight, adj, active=False)
    jax.block_until_ready((output2, az2))
    support2_ref = features @ weight
    output2_ref = adj @ support2_ref
    az2_ref = adj @ output2_ref
    assert jnp.allclose(output2, output2_ref, atol=1e-4, rtol=1e-4)
    assert jnp.allclose(az2, az2_ref, atol=1e-4, rtol=1e-4)

    print("KERNEL_OK")
</pallas_src>

<mosaic_0001>
module attributes {stable_mosaic.version = 11 : i64} {
  func.func @_linear_kernel(%arg0: i32, %arg1: memref<128x64xf32, #tpu.memory_space<vmem>>, %arg2: memref<64x128xf32, #tpu.memory_space<vmem>>, %arg3: memref<128x128xf32, #tpu.memory_space<vmem>>) attributes {dimension_semantics = [#tpu.dimension_semantics<parallel>], iteration_bounds = array<i64: 1>, scalar_prefetch = 0 : i64, scratch_operands = 0 : i64, tpu.core_type = #tpu.core_type<tc>, window_params = [{transform_indices = @transform_0, window_bounds = array<i64: 128, 64>}, {pipeline_mode = #tpu.pipeline_mode<synchronous>, transform_indices = @transform_1, window_bounds = array<i64: 64, 128>}, {transform_indices = @transform_2, window_bounds = array<i64: 128, 128>}]} {
    %c0 = arith.constant 0 : index
    %c0_0 = arith.constant 0 : index
    %0 = vector.load %arg1[%c0, %c0_0] : memref<128x64xf32, #tpu.memory_space<vmem>>, vector<128x64xf32>
    %c0_1 = arith.constant 0 : index
    %c0_2 = arith.constant 0 : index
    %1 = vector.load %arg2[%c0_1, %c0_2] : memref<64x128xf32, #tpu.memory_space<vmem>>, vector<64x128xf32>
    %cst = arith.constant dense<0.000000e+00> : vector<128x128xf32>
    %2 = tpu.matmul %0, %1, %cst {dimension_numbers = #tpu.dot_dimension_numbers<[1], [0], [0], [1], [0, 0, 1, 1], [], []>} : vector<128x64xf32>, vector<64x128xf32>, vector<128x128xf32> -> vector<128x128xf32>
    %cst_3 = arith.constant 0.000000e+00 : f32
    %3 = vector.broadcast %cst_3 : f32 to vector<128x128xf32>
    %4 = arith.cmpf ogt, %2, %3 : vector<128x128xf32>
    %cst_4 = arith.constant 2.000000e-01 : f32
    %5 = vector.broadcast %cst_4 : f32 to vector<128x128xf32>
    %6 = arith.mulf %5, %2 : vector<128x128xf32>
    %7 = arith.select %4, %2, %6 : vector<128x128xi1>, vector<128x128xf32>
    %c0_5 = arith.constant 0 : index
    %c0_6 = arith.constant 0 : index
    %8 = vector.load %arg3[%c0_5, %c0_6] : memref<128x128xf32, #tpu.memory_space<vmem>>, vector<128x128xf32>
    tpu.vector_store %arg3[%c0_5, %c0_6], %7 {strides = array<i32>} : memref<128x128xf32, #tpu.memory_space<vmem>>, vector<128x128xf32>,
    return
  }
  func.func @transform_0(%arg0: i32) -> (i32, i32) {
    %c0_i32 = arith.constant 0 : i32
    %c0_i32_0 = arith.constant 0 : i32
    return %arg0, %c0_i32 : i32, i32
  }
  func.func @transform_1(%arg0: i32) -> (i32, i32) {
    %c0_i32 = arith.constant 0 : i32
    %c0_i32_0 = arith.constant 0 : i32
    %c0_i32_1 = arith.constant 0 : i32
    return %c0_i32, %c0_i32_0 : i32, i32
  }
  func.func @transform_2(%arg0: i32) -> (i32, i32) {
    %c0_i32 = arith.constant 0 : i32
    %c0_i32_0 = arith.constant 0 : i32
    return %arg0, %c0_i32 : i32, i32
  }
}

</mosaic_0001>

<llo_original>
// kernel: tpu_custom_call.1
$region0: #{tpu_custom_call.1}
  #allocation0 [shape = 'u32[]', space=smem, size = 0x4, offset = 0x4, fixed_abs, tag = 'smem constant byte address 0x4 - core index']
  #allocation1 [shape = 'u32[144,128]{1,0:T(1,128)}', space=vmem, size = 0x12000, scoped, tag = 'internal scratch']
  %s0 = inlined_call_operand.vmem [shape: f32[128,64], index: 0, kind: input, shape index: {}]
  %s1 = inlined_call_operand.vmem [shape: f32[64,128], index: 1, kind: input, shape index: {}]
  %s2 = inlined_call_operand.hbm [shape: f32[128,128], index: 2, kind: output, shape index: {}]
  %s3 = sld [smem:[#allocation0]]
  $region18: #{tpu_custom_call.1} parent=0
    _
  %s5 = ssub.s32 1, %s3
  %s6 = scalar_select 0, %s5, %s3
  $region1: #{tpu_custom_call.1} parent=0
    #allocation2 [shape = 'u8[65536]{0}', space=vmem, size = 0x10000, scoped, tag = 'output window, operand 0, single buffered']
    #allocation3 [shape = 's32[1]{0}', space=sflag, size = 0x4, scoped, tag = 'scoped memory for tpu_custom_call.1']
    %7 = vsyncpa [#allocation3], 0
    // Predicated region
    $region2: #{tpu_custom_call.1} parent=1 // pred_check
      _
    $region3: #{tpu_custom_call.1} parent=1 // pred_check_branch
      %9 = sbr.rel (0) target = $region5
    $region4: #{tpu_custom_call.1} parent=1 // pred_region
      _
    $region5: #{tpu_custom_call.1} parent=1 // pred_fallthru
      _
    // Predicated region
    $region6: #{tpu_custom_call.1} parent=1 // pred_check
      _
    $region7: #{tpu_custom_call.1} parent=1 // pred_check_branch
      %11 = sbr.rel (0) target = $region9
    $region8: #{tpu_custom_call.1} parent=1 // pred_region
      _
    $region9: #{tpu_custom_call.1} parent=1 // pred_fallthru
      _
    %v12 = vld [vmem:[%s0] sm:$0xff]
    %v13 = vld [vmem:[%s0 + $0x8] sm:$0xff]
    %v14 = vld [vmem:[%s0 + $0x10] sm:$0xff]
    %v15 = vld [vmem:[%s0 + $0x18] sm:$0xff]
    %v16 = vld [vmem:[%s0 + $0x20] sm:$0xff]
    %v17 = vld [vmem:[%s0 + $0x28] sm:$0xff]
    %v18 = vld [vmem:[%s0 + $0x30] sm:$0xff]
    %v19 = vld [vmem:[%s0 + $0x38] sm:$0xff]
    %v20 = vld [vmem:[%s0 + $0x40] sm:$0xff]
    %v21 = vld [vmem:[%s0 + $0x48] sm:$0xff]
    %v22 = vld [vmem:[%s0 + $0x50] sm:$0xff]
    %v23 = vld [vmem:[%s0 + $0x58] sm:$0xff]
    %v24 = vld [vmem:[%s0 + $0x60] sm:$0xff]
    %v25 = vld [vmem:[%s0 + $0x68] sm:$0xff]
    %v26 = vld [vmem:[%s0 + $0x70] sm:$0xff]
    %v27 = vld [vmem:[%s0 + $0x78] sm:$0xff]
    %v28 = vld [vmem:[%s1] sm:$0xff]
    %v29 = vld [vmem:[%s1 + $0x8] sm:$0xff]
    %v30 = vld [vmem:[%s1 + $0x10] sm:$0xff]
    %v31 = vld [vmem:[%s1 + $0x18] sm:$0xff]
    %v32 = vld [vmem:[%s1 + $0x20] sm:$0xff]
    %v33 = vld [vmem:[%s1 + $0x28] sm:$0xff]
    %v34 = vld [vmem:[%s1 + $0x30] sm:$0xff]
    %v35 = vld [vmem:[%s1 + $0x38] sm:$0xff]
    %vm36 = vcmask 523264
    %v38 = vsel %vm36, %v12, 0
    %v41 = vsel %vm36, %v13, 0
    %v44 = vsel %vm36, %v14, 0
    %v47 = vsel %vm36, %v15, 0
    %v50 = vsel %vm36, %v16, 0
    %v53 = vsel %vm36, %v17, 0
    %v56 = vsel %vm36, %v18, 0
    %v59 = vsel %vm36, %v19, 0
    %v62 = vsel %vm36, %v20, 0
    %v65 = vsel %vm36, %v21, 0
    %v68 = vsel %vm36, %v22, 0
    %v71 = vsel %vm36, %v23, 0
    %v74 = vsel %vm36, %v24, 0
    %v77 = vsel %vm36, %v25, 0
    %v80 = vsel %vm36, %v26, 0
    %v83 = vsel %vm36, %v27, 0
    %85 = vmatprep.subr.mxu0 0.0
    %86 = vmatpush1.msra.mxu0 0.0
    %87 = vmatprep.subr.mxu0 0.0
    %88 = vmatpush1.msra.mxu0 0.0
    %89 = vmatprep.subr.mxu0 0.0
    %90 = vmatpush1.msra.mxu0 0.0
    %91 = vmatprep.subr.mxu0 0.0
    %92 = vmatpush1.msra.mxu0 0.0
    %93 = vmatprep.subr.mxu0 0.0
    %94 = vmatpush1.msra.mxu0 0.0
    %95 = vmatprep.subr.mxu0 0.0
    %96 = vmatpush1.msra.mxu0 0.0
    %97 = vmatprep.subr.mxu0 0.0
    %98 = vmatpush1.msra.mxu0 0.0
    %99 = vmatprep.subr.mxu0 0.0
    %100 = vmatpush1.msra.mxu0 0.0
    %101 = vmatprep.subr.mxu0 0.0
    %102 = vmatpush1.msra.mxu0 %v35
    %103 = vmatprep.subr.mxu0 0.0
    %104 = vmatpush1.msra.mxu0 %v34
    %105 = vmatprep.subr.mxu0 0.0
    %106 = vmatpush1.msra.mxu0 %v33
    %107 = vmatprep.subr.mxu0 0.0
    %108 = vmatpush1.msra.mxu0 %v32
    %109 = vmatprep.subr.mxu0 0.0
    %110 = vmatpush1.msra.mxu0 %v31
    %111 = vmatprep.subr.mxu0 0.0
    %112 = vmatpush1.msra.mxu0 %v30
    %113 = vmatprep.subr.mxu0 0.0
    %114 = vmatpush1.msra.mxu0 %v29
    %115 = vmatprep.subr.mxu0 0.0
    %116 = vmatpush1.msra.mxu0 %v28
    %117 = vmatprep.subr.mxu0 0.0
    %118 = vmatpush2.msra.mxu0 0.0
    %119 = vmatprep.subr.mxu0 0.0
    %120 = vmatpush2.msra.mxu0 0.0
    %121 = vmatprep.subr.mxu0 0.0
    %122 = vmatpush2.msra.mxu0 0.0
    %123 = vmatprep.subr.mxu0 0.0
    %124 = vmatpush2.msra.mxu0 0.0
    %125 = vmatprep.subr.mxu0 0.0
    %126 = vmatpush2.msra.mxu0 0.0
    %127 = vmatprep.subr.mxu0 0.0
    %128 = vmatpush2.msra.mxu0 0.0
    %129 = vmatprep.subr.mxu0 0.0
    %130 = vmatpush2.msra.mxu0 0.0
    %131 = vmatprep.subr.mxu0 0.0
    %132 = vmatpush2.msra.mxu0 0.0
    %133 = vmatprep.subr.mxu0 0.0
    %134 = vmatpush2.msra.mxu0 0.0
    %135 = vmatprep.subr.mxu0 0.0
    %136 = vmatpush2.msra.mxu0 0.0
    %137 = vmatprep.subr.mxu0 0.0
    %138 = vmatpush2.msra.mxu0 0.0
    %139 = vmatprep.subr.mxu0 0.0
    %140 = vmatpush2.msra.mxu0 0.0
    %141 = vmatprep.subr.mxu0 0.0
    %142 = vmatpush2.msra.mxu0 0.0
    %143 = vmatprep.subr.mxu0 0.0
    %144 = vmatpush2.msra.mxu0 0.0
    %145 = vmatprep.subr.mxu0 0.0
    %146 = vmatpush2.msra.mxu0 0.0
    %147 = vmatprep.subr.mxu0 0.0
    %148 = vmatpush2.msra.mxu0 0.0
    %149 = vmatprep.mubr.f32.mxu0 0.0
    %150 = vmatmul.mubr.f32.gmra.mxu0 %v38
    %v151 = vpop.f32.mrf.mxu0
    %v152 = vadd.f32 0.0, %v151
    %v153 = vpop.f32.mrf.mxu0
    %154 = vmatprep.mubr.f32.mxu0 0.0
    %155 = vmatmul.mubr.f32.gmra.mxu0 %v41
    %v156 = vpop.f32.mrf.mxu0
    %v157 = vadd.f32 0.0, %v156
    %v158 = vpop.f32.mrf.mxu0
    %159 = vmatprep.mubr.f32.mxu0 0.0
    %160 = vmatmul.mubr.f32.gmra.mxu0 %v44
    %v161 = vpop.f32.mrf.mxu0
    %v162 = vadd.f32 0.0, %v161
    %v163 = vpop.f32.mrf.mxu0
    %164 = vmatprep.mubr.f32.mxu0 0.0
    %165 = vmatmul.mubr.f32.gmra.mxu0 %v47
    %v166 = vpop.f32.mrf.mxu0
    %v167 = vadd.f32 0.0, %v166
    %v168 = vpop.f32.mrf.mxu0
    %169 = vmatprep.mubr.f32.mxu0 0.0
    %170 = vmatmul.mubr.f32.gmra.mxu0 %v50
    %v171 = vpop.f32.mrf.mxu0
    %v172 = vadd.f32 0.0, %v171
    %v173 = vpop.f32.mrf.mxu0
    %174 = vmatprep.mubr.f32.mxu0 0.0
    %175 = vmatmul.mubr.f32.gmra.mxu0 %v53
    %v176 = vpop.f32.mrf.mxu0
    %v177 = vadd.f32 0.0, %v176
    %v178 = vpop.f32.mrf.mxu0
    %179 = vmatprep.mubr.f32.mxu0 0.0
    %180 = vmatmul.mubr.f32.gmra.mxu0 %v56
    %v181 = vpop.f32.mrf.mxu0
    %v182 = vadd.f32 0.0, %v181
    %v183 = vpop.f32.mrf.mxu0
    %184 = vmatprep.mubr.f32.mxu0 0.0
    %185 = vmatmul.mubr.f32.gmra.mxu0 %v59
    %v186 = vpop.f32.mrf.mxu0
    %v187 = vadd.f32 0.0, %v186
    %v188 = vpop.f32.mrf.mxu0
    %189 = vmatprep.mubr.f32.mxu0 0.0
    %190 = vmatmul.mubr.f32.gmra.mxu0 %v62
    %v191 = vpop.f32.mrf.mxu0
    %v192 = vadd.f32 0.0, %v191
    %v193 = vpop.f32.mrf.mxu0
    %194 = vmatprep.mubr.f32.mxu0 0.0
    %195 = vmatmul.mubr.f32.gmra.mxu0 %v65
    %v196 = vpop.f32.mrf.mxu0
    %v197 = vadd.f32 0.0, %v196
    %v198 = vpop.f32.mrf.mxu0
    %199 = vmatprep.mubr.f32.mxu0 0.0
    %200 = vmatmul.mubr.f32.gmra.mxu0 %v68
    %v201 = vpop.f32.mrf.mxu0
    %v202 = vadd.f32 0.0, %v201
    %v203 = vpop.f32.mrf.mxu0
    %204 = vmatprep.mubr.f32.mxu0 0.0
    %205 = vmatmul.mubr.f32.gmra.mxu0 %v71
    %v206 = vpop.f32.mrf.mxu0
    %v207 = vadd.f32 0.0, %v206
    %v208 = vpop.f32.mrf.mxu0
    %209 = vmatprep.mubr.f32.mxu0 0.0
    %210 = vmatmul.mubr.f32.gmra.mxu0 %v74
    %v211 = vpop.f32.mrf.mxu0
    %v212 = vadd.f32 0.0, %v211
    %v213 = vpop.f32.mrf.mxu0
    %214 = vmatprep.mubr.f32.mxu0 0.0
    %215 = vmatmul.mubr.f32.gmra.mxu0 %v77
    %v216 = vpop.f32.mrf.mxu0
    %v217 = vadd.f32 0.0, %v216
    %v218 = vpop.f32.mrf.mxu0
    %219 = vmatprep.mubr.f32.mxu0 0.0
    %220 = vmatmul.mubr.f32.gmra.mxu0 %v80
    %v221 = vpop.f32.mrf.mxu0
    %v222 = vadd.f32 0.0, %v221
    %v223 = vpop.f32.mrf.mxu0
    %224 = vmatprep.mubr.f32.mxu0 0.0
    %225 = vmatmul.mubr.f32.gmra.mxu0 %v83
    %v226 = vpop.f32.mrf.mxu0
    %v227 = vadd.f32 0.0, %v226
    %v228 = vpop.f32.mrf.mxu0
    %229 = vdwg.mxu0
    %vm230 = vcmp.gt.f32.partialorder %v152, 0.0
    %vm231 = vcmp.gt.f32.partialorder %v157, 0.0
    %vm232 = vcmp.gt.f32.partialorder %v162, 0.0
    %vm233 = vcmp.gt.f32.partialorder %v167, 0.0
    %vm234 = vcmp.gt.f32.partialorder %v172, 0.0
    %vm235 = vcmp.gt.f32.partialorder %v177, 0.0
    %vm236 = vcmp.gt.f32.partialorder %v182, 0.0
    %vm237 = vcmp.gt.f32.partialorder %v187, 0.0
    %vm238 = vcmp.gt.f32.partialorder %v192, 0.0
    %vm239 = vcmp.gt.f32.partialorder %v197, 0.0
    %vm240 = vcmp.gt.f32.partialorder %v202, 0.0
    %vm241 = vcmp.gt.f32.partialorder %v207, 0.0
    %vm242 = vcmp.gt.f32.partialorder %v212, 0.0
    %vm243 = vcmp.gt.f32.partialorder %v217, 0.0
    %vm244 = vcmp.gt.f32.partialorder %v222, 0.0
    %vm245 = vcmp.gt.f32.partialorder %v227, 0.0
    %v246 = vmul.f32 %v152, 0.2
    %v247 = vmul.f32 %v157, 0.2
    %v248 = vmul.f32 %v162, 0.2
    %v249 = vmul.f32 %v167, 0.2
    %v250 = vmul.f32 %v172, 0.2
    %v251 = vmul.f32 %v177, 0.2
    %v252 = vmul.f32 %v182, 0.2
    %v253 = vmul.f32 %v187, 0.2
    %v254 = vmul.f32 %v192, 0.2
    %v255 = vmul.f32 %v197, 0.2
    %v256 = vmul.f32 %v202, 0.2
    %v257 = vmul.f32 %v207, 0.2
    %v258 = vmul.f32 %v212, 0.2
    %v259 = vmul.f32 %v217, 0.2
    %v260 = vmul.f32 %v222, 0.2
    %v261 = vmul.f32 %v227, 0.2
    %v262 = vsel %vm230, %v152, %v246
    %v263 = vsel %vm231, %v157, %v247
    %v264 = vsel %vm232, %v162, %v248
    %v265 = vsel %vm233, %v167, %v249
    %v266 = vsel %vm234, %v172, %v250
    %v267 = vsel %vm235, %v177, %v251
    %v268 = vsel %vm236, %v182, %v252
    %v269 = vsel %vm237, %v187, %v253
    %v270 = vsel %vm238, %v192, %v254
    %v271 = vsel %vm239, %v197, %v255
    %v272 = vsel %vm240, %v202, %v256
    %v273 = vsel %vm241, %v207, %v257
    %v274 = vsel %vm242, %v212, %v258
    %v275 = vsel %vm243, %v217, %v259
    %v276 = vsel %vm244, %v222, %v260
    %v277 = vsel %vm245, %v227, %v261
    %278 = vst [vmem:[#allocation2] sm:$0xff] %v262
    %279 = vst [vmem:[#allocation2 + $0x8] sm:$0xff] %v263
    %280 = vst [vmem:[#allocation2 + $0x10] sm:$0xff] %v264
    %281 = vst [vmem:[#allocation2 + $0x18] sm:$0xff] %v265
    %282 = vst [vmem:[#allocation2 + $0x20] sm:$0xff] %v266
    %283 = vst [vmem:[#allocation2 + $0x28] sm:$0xff] %v267
    %284 = vst [vmem:[#allocation2 + $0x30] sm:$0xff] %v268
    %285 = vst [vmem:[#allocation2 + $0x38] sm:$0xff] %v269
    %286 = vst [vmem:[#allocation2 + $0x40] sm:$0xff] %v270
    %287 = vst [vmem:[#allocation2 + $0x48] sm:$0xff] %v271
    %288 = vst [vmem:[#allocation2 + $0x50] sm:$0xff] %v272
    %289 = vst [vmem:[#allocation2 + $0x58] sm:$0xff] %v273
    %290 = vst [vmem:[#allocation2 + $0x60] sm:$0xff] %v274
    %291 = vst [vmem:[#allocation2 + $0x68] sm:$0xff] %v275
    %292 = vst [vmem:[#allocation2 + $0x70] sm:$0xff] %v276
    %293 = vst [vmem:[#allocation2 + $0x78] sm:$0xff] %v277
    // Predicated region
    $region10: #{tpu_custom_call.1} parent=1 // pred_check
      _
    $region11: #{tpu_custom_call.1} parent=1 // pred_check_branch
      %295 = sbr.rel (0) target = $region13
    $region12: #{tpu_custom_call.1} parent=1 // pred_region
      %s297 = ssub.s32 2048, 2048
      %298 = vsyncadd [#allocation3], %s297
      %s299 = sshll.u32 [#allocation2], 4
      %s300 = int_to_ptr.vmem [resolvable:$true] %s299
      %305 = dma.vmem_to_hbm [thread:$0]  %s300, 2048, %s2, [#allocation3], 128, 128, 8
    $region13: #{tpu_custom_call.1} parent=1 // pred_fallthru
      _
    // Predicated region
    $region14: #{tpu_custom_call.1} parent=1 // pred_check
      _
    $region15: #{tpu_custom_call.1} parent=1 // pred_check_branch
      %307 = sbr.rel (0) target = $region17
    $region16: #{tpu_custom_call.1} parent=1 // pred_region
      %308 = dma.done [#allocation3], 2048
    $region17: #{tpu_custom_call.1} parent=1 // pred_fallthru
      _
    %309 = vsyncpa [#allocation3], 1

</llo_original>
